<compile_context>
chip_gen: v6e
topology: v6e:2x2x1
jax: 0.10.0
libtpu: 0.0.40
codegen_flags: <defaults>
</compile_context>

<pallas_src>
import functools

import jax
import jax.numpy as jnp
from jax.experimental import pallas as pl
from jax.experimental.pallas import tpu as pltpu


def _round_up(x, m):
    return ((x + m - 1) // m) * m


def _downsample_kernel(x_ref, w_ref, shift_ref, o_ref, *, compute_dtype):
    # x_ref:     (bn, Cin, ts)  strided input pixels, spatial last (lane-dense)
    # w_ref:     (Cout, Cin)    1x1 conv weight with BN scale folded in (compute dtype)
    # shift_ref: (Cout, 1)      folded BN shift (f32)
    # o_ref:     (bn, Cout, ts)
    w = w_ref[...]
    shift = shift_ref[...]
    bn = x_ref.shape[0]
    for b in range(bn):  # small static unroll; each iter is one clean MXU matmul
        xb = x_ref[b].astype(compute_dtype)                      # cast on the VMEM tile
        acc = jnp.dot(w, xb, preferred_element_type=jnp.float32)  # (Cout, ts), f32 acc
        o_ref[b] = (acc + shift).astype(o_ref.dtype)


def _vmem_ceiling():
    """Scoped-VMEM ceiling with headroom, derived from the chip when possible."""
    cap = None
    try:
        info = pltpu.get_tpu_info()
        for attr in ("vmem_capacity_bytes", "vmem_size_bytes", "vmem_bytes"):
            v = getattr(info, attr, None)
            if v:
                cap = int(v)
                break
    except Exception:
        cap = None
    if not cap:
        cap = 64 * 1024 * 1024  # conservative fallback: v7x physical VMEM per TC
    # ~75% of physical leaves room for compiler temporaries; never above 100 MiB.
    return min((cap * 3) // 4, 100 * 1024 * 1024)


def _plan_tiles(N, Cin, Cout, S, ts, es_x, es_w, es_o, ceiling):
    """Choose (batch_block, spatial_tile) so each grid step carries >= ~512
    output lanes (amortizes ~0.35us/step and feeds the 256-wide MXU) while
    ~1.5x the double-buffered VMEM need stays under `ceiling`."""
    LANE = 128
    max_lanes = max(LANE, (ts // LANE) * LANE)

    def spatial_tile(cap):
        if S <= cap:
            return S                                   # one full-extent tile: no padding
        n = pl.cdiv(S, cap)
        return _round_up(pl.cdiv(S, n), LANE)          # minimal padding for that count

    def need(bn, tse):
        return (2 * bn * Cin * tse * es_x              # double-buffered x tiles
                + 2 * bn * Cout * tse * es_o           # double-buffered out tiles
                + 2 * Cout * Cin * es_w                # resident weight (2 bufs)
                + 2 * Cout * 4)                        # BN shift

    ts_eff = spatial_tile(max_lanes)
    bn = 1
    if ts_eff < 512:                                   # small-S stage: batch images
        bn = max(1, min(N, 512 // max(ts_eff, 1)))
    if N >= 2:                                         # keep >=2 batch blocks (v7x 2 TCs)
        bn = min(bn, pl.cdiv(N, 2))
    bn = max(bn, 1)

    cap = max_lanes
    while int(1.5 * need(bn, ts_eff)) > ceiling:
        if bn > 1:
            bn //= 2
        elif ts_eff > LANE:
            cap = max(LANE, ((min(ts_eff, cap) // 2) // LANE) * LANE)
            new_ts = spatial_tile(cap)
            if new_ts >= ts_eff:
                break
            ts_eff = new_ts
        else:
            break
    return bn, ts_eff, need(bn, ts_eff)


def downsample_forward(x_nchw, conv_w, bn_gamma, bn_beta, bn_mean, bn_var,
                       *, stride, eps=1e-5, ts=1024,
                       compute_dtype=jnp.bfloat16, out_dtype=None):
    """Conv2d(1x1, stride, bias=False) + BatchNorm2d (eval mode) on NCHW input."""
    N, Cin, H, W = x_nchw.shape
    Cout = conv_w.shape[0]
    out_dt = jnp.dtype(out_dtype) if out_dtype is not None else jnp.dtype(x_nchw.dtype)
    cdt = jnp.dtype(compute_dtype) if compute_dtype is not None else jnp.dtype(x_nchw.dtype)

    # A 1x1 strided conv reads only the strided pixel grid.  Stay in NCHW so no
    # transposes are needed anywhere; this slice is the single pre-kernel
    # activation op (identity for stride=1) and may be fused into the input DMA.
    x_s = x_nchw if stride == 1 else x_nchw[:, :, ::stride, ::stride]
    Ho, Wo = x_s.shape[2], x_s.shape[3]
    S = Ho * Wo
    x_flat = x_s.reshape(N, Cin, S)        # contiguous reshape: no copy
    # NOTE: no astype / jnp.pad here — cast happens in-kernel, partial final
    # blocks are handled (and masked on store) by Pallas.

    # Fold eval-mode BN into the conv weight:  y = (scale*W) x + shift.
    scale = bn_gamma.astype(jnp.float32) / jnp.sqrt(bn_var.astype(jnp.float32) + eps)
    shift = (bn_beta.astype(jnp.float32) - bn_mean.astype(jnp.float32) * scale)
    shift = shift.reshape(Cout, 1)                                           # stays f32
    w = (conv_w.reshape(Cout, Cin).astype(jnp.float32) * scale[:, None]).astype(cdt)

    es_x = jnp.dtype(x_flat.dtype).itemsize
    es_w = jnp.dtype(cdt).itemsize
    es_o = jnp.dtype(out_dt).itemsize

    ceiling = _vmem_ceiling()
    bn_blk, ts_eff, vmem_need = _plan_tiles(N, Cin, Cout, S, ts, es_x, es_w, es_o, ceiling)
    vmem_limit = int(max(4 * 1024 * 1024, min(ceiling, int(1.75 * vmem_need))))

    grid = (pl.cdiv(N, bn_blk), pl.cdiv(S, ts_eff))

    cost = pl.CostEstimate(
        flops=2 * N * S * Cin * Cout,
        transcendentals=0,
        bytes_accessed=N * S * (Cin * es_x + Cout * es_o) + Cout * Cin * es_w,
    )

    kernel = functools.partial(_downsample_kernel, compute_dtype=cdt)

    out_flat = pl.pallas_call(
        kernel,
        out_shape=jax.ShapeDtypeStruct((N, Cout, S), out_dt),
        grid_spec=pltpu.PrefetchScalarGridSpec(
            num_scalar_prefetch=0,
            grid=grid,
            in_specs=[
                pl.BlockSpec((bn_blk, Cin, ts_eff), lambda nb, j: (nb, 0, j)),
                pl.BlockSpec((Cout, Cin), lambda nb, j: (0, 0)),
                pl.BlockSpec((Cout, 1), lambda nb, j: (0, 0)),
            ],
            out_specs=pl.BlockSpec((bn_blk, Cout, ts_eff), lambda nb, j: (nb, 0, j)),
        ),
        compiler_params=pltpu.CompilerParams(
            dimension_semantics=("parallel", "parallel"),
            vmem_limit_bytes=vmem_limit,
            allow_input_fusion=[True, False, False],   # let XLA fold the slice/reshape
        ),
        cost_estimate=cost,
    )(x_flat, w, shift)

    # Already NCHW; contiguous reshape back to (N, Cout, Ho, Wo).
    return out_flat.reshape(N, Cout, Ho, Wo)


if __name__ == "__main__":
    key = jax.random.PRNGKey(0)
    k_x, k_w, k_m, k_v, k_g, k_b = jax.random.split(key, 6)

    # Small, ResNet-downsample-like shapes.
    N, Cin, H, W = 2, 4, 16, 16
    Cout, stride = 8, 2

    x = jax.random.normal(k_x, (N, Cin, H, W), dtype=jnp.float32)
    conv_w = jax.random.normal(k_w, (Cout, Cin, 1, 1), dtype=jnp.float32) * 0.1
    bn_gamma = 1.0 + 0.1 * jax.random.normal(k_g, (Cout,), dtype=jnp.float32)
    bn_beta = 0.1 * jax.random.normal(k_b, (Cout,), dtype=jnp.float32)
    bn_mean = 0.1 * jax.random.normal(k_m, (Cout,), dtype=jnp.float32)
    bn_var = jnp.abs(jax.random.normal(k_v, (Cout,), dtype=jnp.float32)) + 0.5

    # Pure-JAX reference (strided 1x1 conv + eval-mode BN).
    inv = bn_gamma / jnp.sqrt(bn_var + 1e-5)

    def reference(x_in, s):
        xs = x_in[:, :, ::s, ::s]
        r = jnp.einsum("nchw,oc->nohw", xs, conv_w.reshape(Cout, Cin))
        return (r - bn_mean[None, :, None, None]) * inv[None, :, None, None] \
               + bn_beta[None, :, None, None]

    ref = reference(x, stride)

    # Exact f32-feed path: tight tolerance.
    out_f32 = downsample_forward(x, conv_w, bn_gamma, bn_beta, bn_mean, bn_var,
                                 stride=stride, compute_dtype=jnp.float32)
    out_f32 = jax.block_until_ready(out_f32)
    assert out_f32.shape == (N, Cout, H // stride, W // stride)
    assert jnp.allclose(out_f32, ref, atol=1e-4, rtol=1e-4)

    # Default production path: bf16 MXU feeds, f32 accumulation, f32 output.
    out_bf = downsample_forward(x, conv_w, bn_gamma, bn_beta, bn_mean, bn_var,
                                stride=stride)
    out_bf = jax.block_until_ready(out_bf)
    assert jnp.allclose(out_bf, ref, atol=5e-2, rtol=5e-2)

    # stride=1 path (no pre-kernel slice at all) with bf16 writeback.
    ref1 = reference(x, 1)
    out1 = downsample_forward(x, conv_w, bn_gamma, bn_beta, bn_mean, bn_var,
                              stride=1, out_dtype=jnp.bfloat16)
    out1 = jax.block_until_ready(out1)
    assert out1.shape == (N, Cout, H, W)
    assert jnp.allclose(out1.astype(jnp.float32), ref1, atol=5e-2, rtol=5e-2)

    print("KERNEL_OK")
</pallas_src>

<mosaic_0001>
module attributes {stable_mosaic.version = 11 : i64} {
  func.func @_downsample_kernel(%arg0: i32, %arg1: i32, %arg2: memref<1x4x64xf32, #tpu.memory_space<vmem>>, %arg3: memref<8x4xf32, #tpu.memory_space<vmem>>, %arg4: memref<8x1xf32, #tpu.memory_space<vmem>>, %arg5: memref<1x8x64xf32, #tpu.memory_space<vmem>>) attributes {dimension_semantics = [#tpu.dimension_semantics<parallel>, #tpu.dimension_semantics<parallel>], iteration_bounds = array<i64: 2, 1>, scalar_prefetch = 0 : i64, scratch_operands = 0 : i64, tpu.core_type = #tpu.core_type<tc>, window_params = [{transform_indices = @transform_0, window_bounds = array<i64: 1, 4, 64>}, {pipeline_mode = #tpu.pipeline_mode<synchronous>, transform_indices = @transform_1, window_bounds = array<i64: 8, 4>}, {pipeline_mode = #tpu.pipeline_mode<synchronous>, transform_indices = @transform_2, window_bounds = array<i64: 8, 1>}, {transform_indices = @transform_3, window_bounds = array<i64: 1, 8, 64>}]} {
    %c0 = arith.constant 0 : index
    %c0_0 = arith.constant 0 : index
    %0 = vector.load %arg3[%c0, %c0_0] : memref<8x4xf32, #tpu.memory_space<vmem>>, vector<8x4xf32>
    %c0_1 = arith.constant 0 : index
    %c0_2 = arith.constant 0 : index
    %1 = vector.load %arg4[%c0_1, %c0_2] : memref<8x1xf32, #tpu.memory_space<vmem>>, vector<8x1xf32>
    %c0_3 = arith.constant 0 : index
    %c0_4 = arith.constant 0 : index
    %c0_5 = arith.constant 0 : index
    %2 = vector.load %arg2[%c0_3, %c0_4, %c0_5] : memref<1x4x64xf32, #tpu.memory_space<vmem>>, vector<1x4x64xf32>
    %3 = vector.shape_cast %2 : vector<1x4x64xf32> to vector<4x64xf32>
    %cst = arith.constant dense<0.000000e+00> : vector<8x64xf32>
    %4 = tpu.matmul %0, %3, %cst {dimension_numbers = #tpu.dot_dimension_numbers<[1], [0], [0], [1], [0, 0, 1, 1], [], []>} : vector<8x4xf32>, vector<4x64xf32>, vector<8x64xf32> -> vector<8x64xf32>
    %5 = vector.broadcast %1 : vector<8x1xf32> to vector<8x64xf32>
    %6 = arith.addf %4, %5 : vector<8x64xf32>
    %c0_6 = arith.constant 0 : index
    %c0_7 = arith.constant 0 : index
    %c0_8 = arith.constant 0 : index
    %7 = vector.load %arg5[%c0_6, %c0_7, %c0_8] : memref<1x8x64xf32, #tpu.memory_space<vmem>>, vector<1x8x64xf32>
    %8 = vector.shape_cast %7 : vector<1x8x64xf32> to vector<8x64xf32>
    %9 = vector.shape_cast %6 : vector<8x64xf32> to vector<1x8x64xf32>
    tpu.vector_store %arg5[%c0_6, %c0_7, %c0_8], %9 {strides = array<i32>} : memref<1x8x64xf32, #tpu.memory_space<vmem>>, vector<1x8x64xf32>,
    return
  }
  func.func @transform_0(%arg0: i32, %arg1: i32) -> (i32, i32, i32) {
    %c0_i32 = arith.constant 0 : i32
    %c0_i32_0 = arith.constant 0 : i32
    return %arg0, %c0_i32, %arg1 : i32, i32, i32
  }
  func.func @transform_1(%arg0: i32, %arg1: i32) -> (i32, i32) {
    %c0_i32 = arith.constant 0 : i32
    %c0_i32_0 = arith.constant 0 : i32
    %c0_i32_1 = arith.constant 0 : i32
    return %c0_i32, %c0_i32_0 : i32, i32
  }
  func.func @transform_2(%arg0: i32, %arg1: i32) -> (i32, i32) {
    %c0_i32 = arith.constant 0 : i32
    %c0_i32_0 = arith.constant 0 : i32
    %c0_i32_1 = arith.constant 0 : i32
    return %c0_i32, %c0_i32_0 : i32, i32
  }
  func.func @transform_3(%arg0: i32, %arg1: i32) -> (i32, i32, i32) {
    %c0_i32 = arith.constant 0 : i32
    %c0_i32_0 = arith.constant 0 : i32
    return %arg0, %c0_i32, %arg1 : i32, i32, i32
  }
}

</mosaic_0001>

<llo_original>
// kernel: tpu_custom_call.1
$region0: #{tpu_custom_call.1}
  #allocation0 [shape = 'u32[]', space=smem, size = 0x4, offset = 0x4, fixed_abs, tag = 'smem constant byte address 0x4 - core index']
  #allocation1 [shape = 'u32[144,128]{1,0:T(1,128)}', space=vmem, size = 0x12000, scoped, tag = 'internal scratch']
  %s0 = inlined_call_operand.vmem [shape: f32[2,4,64], index: 0, kind: input, shape index: {}]
  %s1 = inlined_call_operand.vmem [shape: f32[8,4], index: 1, kind: input, shape index: {}]
  %s2 = inlined_call_operand.vmem [shape: f32[8,1], index: 2, kind: input, shape index: {}]
  %s3 = inlined_call_operand.hbm [shape: f32[2,8,64], index: 3, kind: output, shape index: {}]
  %s4 = sld [smem:[#allocation0]]
  $region45: #{tpu_custom_call.1} parent=0
    _
  %s6 = ssub.s32 1, %s4
  %s7 = scalar_select 0, %s6, %s4
  $region1: #{tpu_custom_call.1} parent=0
    #allocation2 [shape = 'u8[8192]{0}', space=vmem, size = 0x2000, scoped, tag = 'output window, operand 0']
    #allocation3 [shape = 's32[2]{0}', space=sflag, size = 0x8, scoped, tag = 'scoped memory for tpu_custom_call.1']
    %8 = vsyncpa [#allocation3], 0
    %s9 = scalar_lea.sflag [#allocation3], 1
    %10 = vsyncpa %s9, 0
    loop: start=0, step=1, limit=4
    $region2: #{tpu_custom_call.1} parent=1 // loop_pre_header
      _
    $region3: #{tpu_custom_call.1} parent=1 // loop_header
      %s12 = sphi 0, %s16
      %p13 = scmp.ge.s32.totalorder %s12, 4
      %s19 = sphi 0, %s31
      %s20 = sphi 0, %s27
      %s21 = sphi 0, %s19
      %s22 = sphi 0, %s20
      %s23 = sphi 0, %s21
      %s24 = sphi 0, %s22
      %s36 = sphi 0, %s38
      %s39 = sphi 0, %s36
      %s40 = sphi 0, %s39
      %s56 = sphi 0, %s40
      %s60 = sphi 0, %s60
      %s62 = sphi 0, %s60
      %s63 = sphi 0, %s62
      %s77 = sphi 0, %s63
      %s81 = sphi 0, %s81
      %s83 = sphi 0, %s81
      %s84 = sphi 0, %s83
      %s98 = sphi 0, %s84
      %s106 = sphi 0, %s108
      %s109 = sphi 0, %s106
      %s110 = sphi 0, %s109
      %s126 = sphi 0, %s110
    $region4: #{tpu_custom_call.1} parent=1 // loop_header_branch
      %15 = sbr.rel (%p13) target = $region8
    $region5: #{tpu_custom_call.1} parent=1 // loop_body
      %s17 = ssub.s32 %s12, 1
      %s18 = ssub.s32 %s12, 2
      %s25 = sadd.s32 1, %s20
      %p26 = scmp.ge.s32.totalorder %s25, 1
      %s27 = scalar_select %p26, 0, %s25
      %s28 = sadd.s32 1, %s19
      %s29 = scalar_select %p26, %s28, %s19
      %p30 = scmp.ge.s32.totalorder %s29, 2
      %s31 = scalar_select %p30, 0, %s29
      %s32 = ssub.s32 %s19, %s31
      %s33 = ssub.s32 %s20, %s27
      %s34 = sor.u32 %s32, %s33
      %p35 = scmp.eq.s32.totalorder %s34, 0
      %s37 = sadd.s32 %s36, 1
      %s38 = scalar_select %p35, %s36, %s37
      %p41 = pneg %p35
      %p42 = scmp.eq.s32.totalorder %s12, 1
      %p43 = por %p41, %p42
      %p44 = scmp.ne.s32.totalorder %s36, %s39
      %p45 = scmp.eq.s32.totalorder %s12, 0
      %p46 = por %p44, %p45
      %p47 = scmp.ne.s32.totalorder %s36, %s39
      %p48 = scmp.eq.s32.totalorder %s17, 1
      %p49 = por %p47, %p48
      %p50 = scmp.ne.s32.totalorder %s39, %s40
      %p51 = scmp.eq.s32.totalorder %s17, 0
      %p52 = por %p50, %p51
      %p53 = scmp.ne.s32.totalorder %s39, %s40
      %p54 = scmp.eq.s32.totalorder %s18, 1
      %p55 = por %p53, %p54
      %p57 = scmp.ne.s32.totalorder %s40, %s56
      %p58 = scmp.eq.s32.totalorder %s18, 0
      %p59 = por %p57, %p58
      %s61 = sadd.s32 %s60, 1
      %p64 = scmp.eq.s32.totalorder %s12, 1
      %p65 = scmp.ne.s32.totalorder %s60, %s62
      %p66 = scmp.eq.s32.totalorder %s12, 0
      %p67 = por %p65, %p66
      %p68 = scmp.ne.s32.totalorder %s60, %s62
      %p69 = scmp.eq.s32.totalorder %s17, 1
      %p70 = por %p68, %p69
      %p71 = scmp.ne.s32.totalorder %s62, %s63
      %p72 = scmp.eq.s32.totalorder %s17, 0
      %p73 = por %p71, %p72
      %p74 = scmp.ne.s32.totalorder %s62, %s63
      %p75 = scmp.eq.s32.totalorder %s18, 1
      %p76 = por %p74, %p75
      %p78 = scmp.ne.s32.totalorder %s63, %s77
      %p79 = scmp.eq.s32.totalorder %s18, 0
      %p80 = por %p78, %p79
      %s82 = sadd.s32 %s81, 1
      %p85 = scmp.eq.s32.totalorder %s12, 1
      %p86 = scmp.ne.s32.totalorder %s81, %s83
      %p87 = scmp.eq.s32.totalorder %s12, 0
      %p88 = por %p86, %p87
      %p89 = scmp.ne.s32.totalorder %s81, %s83
      %p90 = scmp.eq.s32.totalorder %s17, 1
      %p91 = por %p89, %p90
      %p92 = scmp.ne.s32.totalorder %s83, %s84
      %p93 = scmp.eq.s32.totalorder %s17, 0
      %p94 = por %p92, %p93
      %p95 = scmp.ne.s32.totalorder %s83, %s84
      %p96 = scmp.eq.s32.totalorder %s18, 1
      %p97 = por %p95, %p96
      %p99 = scmp.ne.s32.totalorder %s84, %s98
      %p100 = scmp.eq.s32.totalorder %s18, 0
      %p101 = por %p99, %p100
      %s102 = ssub.s32 %s19, %s31
      %s103 = ssub.s32 %s20, %s27
      %s104 = sor.u32 %s102, %s103
      %p105 = scmp.eq.s32.totalorder %s104, 0
      %s107 = sadd.s32 %s106, 1
      %s108 = scalar_select %p105, %s106, %s107
      %p111 = pneg %p105
      %p112 = scmp.eq.s32.totalorder %s12, 1
      %p113 = por %p111, %p112
      %p114 = scmp.ne.s32.totalorder %s106, %s109
      %p115 = scmp.eq.s32.totalorder %s12, 0
      %p116 = por %p114, %p115
      %p117 = scmp.ne.s32.totalorder %s106, %s109
      %p118 = scmp.eq.s32.totalorder %s17, 1
      %p119 = por %p117, %p118
      %p120 = scmp.ne.s32.totalorder %s109, %s110
      %p121 = scmp.eq.s32.totalorder %s17, 0
      %p122 = por %p120, %p121
      %p123 = scmp.ne.s32.totalorder %s109, %s110
      %p124 = scmp.eq.s32.totalorder %s18, 1
      %p125 = por %p123, %p124
      %p127 = scmp.ne.s32.totalorder %s110, %s126
      %p128 = scmp.eq.s32.totalorder %s18, 0
      %p129 = por %p127, %p128
      %p130 = scmp.le.s32.totalorder 1, %s12
      %p131 = scmp.lt.s32.totalorder %s12, 3
      %p132 = pnand %p130, %p131
      %p133 = pneg %p132
      // Predicated region
      $region9: #{tpu_custom_call.1} parent=5 // pred_check
        _
      $region10: #{tpu_custom_call.1} parent=5 // pred_check_branch
        %135 = sbr.rel (%p132) target = $region12
      $region11: #{tpu_custom_call.1} parent=5 // pred_region
        %s136 = ssub.s32 %s12, 1
        // Predicated region
        $region13: #{tpu_custom_call.1} parent=11 // pred_check
          %p137 = pneg %p73
        $region14: #{tpu_custom_call.1} parent=11 // pred_check_branch
          %139 = sbr.rel (%p137) target = $region16
        $region15: #{tpu_custom_call.1} parent=11 // pred_region
          _
        $region16: #{tpu_custom_call.1} parent=11 // pred_fallthru
          _
        // Predicated region
        $region17: #{tpu_custom_call.1} parent=11 // pred_check
          %p140 = pneg %p94
        $region18: #{tpu_custom_call.1} parent=11 // pred_check_branch
          %142 = sbr.rel (%p140) target = $region20
        $region19: #{tpu_custom_call.1} parent=11 // pred_region
          _
        $region20: #{tpu_custom_call.1} parent=11 // pred_fallthru
          _
      $region12: #{tpu_custom_call.1} parent=5 // pred_fallthru
        _
      %p143 = scmp.lt.s32.totalorder %s12, 2
      // Predicated region
      $region21: #{tpu_custom_call.1} parent=5 // pred_check
        %p144 = pneg %p143
      $region22: #{tpu_custom_call.1} parent=5 // pred_check_branch
        %146 = sbr.rel (%p144) target = $region24
      $region23: #{tpu_custom_call.1} parent=5 // pred_region
        // Predicated region
        $region25: #{tpu_custom_call.1} parent=23 // pred_check
          %p147 = pneg %p46
        $region26: #{tpu_custom_call.1} parent=23 // pred_check_branch
          %149 = sbr.rel (%p147) target = $region28
        $region27: #{tpu_custom_call.1} parent=23 // pred_region
          %p150 = scmp.lt.s32.totalorder %s19, 1
          %s151 = scalar_select %p150, %s19, 1
          %p152 = scmp.lt.s32.totalorder %s20, 0
          %s153 = scalar_select %p152, %s20, 0
          %s154 = sadd.s32 %s153, %s151
          %s155 = smul.addr %s154, 4
          %s156 = scalar_lea.vmem %s0, %s155
        $region28: #{tpu_custom_call.1} parent=23 // pred_fallthru
          _
      $region24: #{tpu_custom_call.1} parent=5 // pred_fallthru
        _
      %p157 = scmp.le.s32.totalorder 1, %s12
      %p158 = scmp.lt.s32.totalorder %s12, 3
      %p159 = pnand %p157, %p158
      %p160 = pneg %p159
      // Predicated region
      $region29: #{tpu_custom_call.1} parent=5 // pred_check
        _
      $region30: #{tpu_custom_call.1} parent=5 // pred_check_branch
        %162 = sbr.rel (%p159) target = $region32
      $region31: #{tpu_custom_call.1} parent=5 // pred_region
        %s163 = ssub.s32 %s12, 1
        %p164 = scmp.lt.s32.totalorder %s21, 1
        %s165 = scalar_select %p164, %s21, 1
        %p166 = scmp.lt.s32.totalorder %s22, 0
        %s167 = scalar_select %p166, %s22, 0
        %s168 = sadd.s32 %s167, %s165
        %s169 = smul.addr %s168, 4
        %s170 = scalar_lea.vmem %s0, %s169
        %p171 = pneg %p52
        %p172 = pneg %p49
        %p173 = pneg %p73
        %p174 = pneg %p70
        %p175 = pneg %p94
        %p176 = pneg %p91
        %p177 = pneg %p122
        %p178 = pneg %p119
        %s179 = sand.u32 %s109, 1
        %s180 = scalar_lea.sflag [#allocation3], %s179
        %s181 = sand.u32 %s109, 1
        %s182 = smul.addr %s181, 8
        %s183 = scalar_lea.vmem [#allocation2], %s182
        %p184 = scmp.lt.s32.totalorder %s21, 1
        %s185 = scalar_select %p184, %s21, 1
        %p186 = scmp.lt.s32.totalorder %s22, 0
        %s187 = scalar_select %p186, %s22, 0
        %s188 = sadd.s32 %s187, %s185
        %s189 = smul.addr %s188, 4
        %s190 = scalar_lea.vmem %s0, %s189
        %v191 = vld [vmem:[%s1] sm:$0xff]
        %v192 = vld [vmem:[%s2] sm:$0xff]
        %v193 = vld [vmem:[%s190] sm:$0xf]
        %195 = vset.pattern.permute.xlu0 0
        %196 = vperm.xlu0 %195, %v192
        %v197 = vpop.permute.xlu0 %196
        %vm199 = vcmask 31744
        %v201 = vsel %vm199, %v191, 0
        %vm203 = vcmask 1043456
        %v205 = vsel %vm203, %v193, 0
        %207 = vmatprep.subr.mxu0 0.0
        %208 = vmatpush1.msra.mxu0 0.0
        %209 = vmatprep.subr.mxu0 0.0
        %210 = vmatpush1.msra.mxu0 0.0
        %211 = vmatprep.subr.mxu0 0.0
        %212 = vmatpush1.msra.mxu0 0.0
        %213 = vmatprep.subr.mxu0 0.0
        %214 = vmatpush1.msra.mxu0 0.0
        %215 = vmatprep.subr.mxu0 0.0
        %216 = vmatpush1.msra.mxu0 0.0
        %217 = vmatprep.subr.mxu0 0.0
        %218 = vmatpush1.msra.mxu0 0.0
        %219 = vmatprep.subr.mxu0 0.0
        %220 = vmatpush1.msra.mxu0 0.0
        %221 = vmatprep.subr.mxu0 0.0
        %222 = vmatpush1.msra.mxu0 0.0
        %223 = vmatprep.subr.mxu0 0.0
        %224 = vmatpush1.msra.mxu0 0.0
        %225 = vmatprep.subr.mxu0 0.0
        %226 = vmatpush1.msra.mxu0 0.0
        %227 = vmatprep.subr.mxu0 0.0
        %228 = vmatpush1.msra.mxu0 0.0
        %229 = vmatprep.subr.mxu0 0.0
        %230 = vmatpush1.msra.mxu0 0.0
        %231 = vmatprep.subr.mxu0 0.0
        %232 = vmatpush1.msra.mxu0 0.0
        %233 = vmatprep.subr.mxu0 0.0
        %234 = vmatpush1.msra.mxu0 0.0
        %235 = vmatprep.subr.mxu0 0.0
        %236 = vmatpush1.msra.mxu0 0.0
        %237 = vmatprep.subr.mxu0 0.0
        %238 = vmatpush1.msra.mxu0 %v205
        %239 = vmatprep.subr.mxu0 0.0
        %240 = vmatpush2.msra.mxu0 0.0
        %241 = vmatprep.subr.mxu0 0.0
        %242 = vmatpush2.msra.mxu0 0.0
        %243 = vmatprep.subr.mxu0 0.0
        %244 = vmatpush2.msra.mxu0 0.0
        %245 = vmatprep.subr.mxu0 0.0
        %246 = vmatpush2.msra.mxu0 0.0
        %247 = vmatprep.subr.mxu0 0.0
        %248 = vmatpush2.msra.mxu0 0.0
        %249 = vmatprep.subr.mxu0 0.0
        %250 = vmatpush2.msra.mxu0 0.0
        %251 = vmatprep.subr.mxu0 0.0
        %252 = vmatpush2.msra.mxu0 0.0
        %253 = vmatprep.subr.mxu0 0.0
        %254 = vmatpush2.msra.mxu0 0.0
        %255 = vmatprep.subr.mxu0 0.0
        %256 = vmatpush2.msra.mxu0 0.0
        %257 = vmatprep.subr.mxu0 0.0
        %258 = vmatpush2.msra.mxu0 0.0
        %259 = vmatprep.subr.mxu0 0.0
        %260 = vmatpush2.msra.mxu0 0.0
        %261 = vmatprep.subr.mxu0 0.0
        %262 = vmatpush2.msra.mxu0 0.0
        %263 = vmatprep.subr.mxu0 0.0
        %264 = vmatpush2.msra.mxu0 0.0
        %265 = vmatprep.subr.mxu0 0.0
        %266 = vmatpush2.msra.mxu0 0.0
        %267 = vmatprep.subr.mxu0 0.0
        %268 = vmatpush2.msra.mxu0 0.0
        %269 = vmatprep.subr.mxu0 0.0
        %270 = vmatpush2.msra.mxu0 0.0
        %271 = vmatprep.mubr.f32.mxu0 0.0
        %272 = vmatmul.mubr.f32.gmra.mxu0 %v201
        %v273 = vpop.f32.mrf.mxu0
        %v274 = vadd.f32 %v197, %v273
        %v275 = vpop.f32.mrf.mxu0
        %276 = vdwg.mxu0
        %vm277 = vcmask 523264
        %278 = vst.msk [vmem:[%s183] sm:$0xff] %vm277, %v274
        %s279 = sand.u32 %s109, 1
        %s280 = scalar_lea.sflag [#allocation3], %s279
        %s281 = sand.u32 %s109, 1
        %s282 = smul.addr %s281, 8
        %s283 = scalar_lea.vmem [#allocation2], %s282
        // Predicated region
        $region33: #{tpu_custom_call.1} parent=31 // pred_check
          %p284 = pneg %p119
        $region34: #{tpu_custom_call.1} parent=31 // pred_check_branch
          %286 = sbr.rel (%p284) target = $region36
        $region35: #{tpu_custom_call.1} parent=31 // pred_region
          %s288 = ssub.s32 128, 128
          %289 = vsyncadd %s280, %s288
          %s290 = sadd.s32 %s22, %s21
          %s291 = smul.addr %s290, 128
          %s292 = scalar_lea.hbm %s3, %s291
          %s294 = sshll.u32 %s283, 4
          %s295 = int_to_ptr.vmem [resolvable:$true] %s294
          %297 = dma.vmem_to_hbm [thread:$0]  %s295, 128, %s292, %s280
        $region36: #{tpu_custom_call.1} parent=31 // pred_fallthru
          _
      $region32: #{tpu_custom_call.1} parent=5 // pred_fallthru
        _
      %p298 = scmp.le.s32.totalorder 2, %s12
      // Predicated region
      $region37: #{tpu_custom_call.1} parent=5 // pred_check
        %p299 = pneg %p298
      $region38: #{tpu_custom_call.1} parent=5 // pred_check_branch
        %301 = sbr.rel (%p299) target = $region40
      $region39: #{tpu_custom_call.1} parent=5 // pred_region
        %s302 = ssub.s32 %s12, 2
        // Predicated region
        $region41: #{tpu_custom_call.1} parent=39 // pred_check
          %p303 = pneg %p125
        $region42: #{tpu_custom_call.1} parent=39 // pred_check_branch
          %305 = sbr.rel (%p303) target = $region44
        $region43: #{tpu_custom_call.1} parent=39 // pred_region
          %s306 = sand.u32 %s110, 1
          %s307 = scalar_lea.sflag [#allocation3], %s306
          %s308 = sand.u32 %s110, 1
          %s309 = smul.addr %s308, 8
          %s310 = scalar_lea.vmem [#allocation2], %s309
          %311 = dma.done %s307, 128
        $region44: #{tpu_custom_call.1} parent=39 // pred_fallthru
          _
      $region40: #{tpu_custom_call.1} parent=5 // pred_fallthru
        _
    $region6: #{tpu_custom_call.1} parent=1 // loop_footer
      %s16 = sadd.s32 1, %s12
    $region7: #{tpu_custom_call.1} parent=1 // loop_footer_branch
      %11 = sbr.rel target = $region3
    $region8: #{tpu_custom_call.1} parent=1 // loop_exit
      _
    %312 = vsyncpa [#allocation3], 1
    %s313 = scalar_lea.sflag [#allocation3], 1
    %314 = vsyncpa %s313, 1

</llo_original>
